<compile_context>
chip_gen: v7x
topology: tpu7x:2x2x1
jax: 0.10.0
libtpu: 0.0.40
codegen_flags: <defaults>
</compile_context>

<pallas_src>
import functools

import jax
import jax.numpy as jnp
from jax import lax
from jax.experimental import pallas as pl
from jax.experimental.pallas import tpu as pltpu

_LANE = 128
_SUB = 8
_MAX_BLOCK_ROWS = 8192     # (8192, 128) f32 tile = 4 MiB per pipeline buffer
_NUM_SPLITS = 2            # leading "parallel" axis (dual TensorCore on v7x;
                           # measured ~neutral on single-TC v5e/v6e)
_SMALL_N = 1 << 16         # below this, pallas_call fixed cost dominates


def _sigmoid_eup(x):
    # sigmoid(x) == 0.5*tanh(0.5*x) + 0.5 : keeps the transcendental on the
    # EUP slot and avoids an f32 divide expanding into VALU Newton-Raphson
    # (matters most on v5e; neutral-to-positive on v6e/v7x).
    return 0.5 * jnp.tanh(0.5 * x) + 0.5


def _focal_tversky_kernel(x_ref, t_ref, pt_ref, p_ref, tt_ref, *,
                          rows, block_rows, blocks_per_split):
    s = pl.program_id(0)          # parallel split
    i = pl.program_id(1)          # reduction step within this split

    @pl.when(i == 0)
    def _init():
        pt_ref[...] = jnp.zeros_like(pt_ref)
        p_ref[...] = jnp.zeros_like(p_ref)
        tt_ref[...] = jnp.zeros_like(tt_ref)

    blk = s * blocks_per_split + i
    rows_rem = rows - blk * block_rows      # valid rows in this block (<=0 => phantom)

    p = _sigmoid_eup(x_ref[...].astype(jnp.float32))
    t = t_ref[...].astype(jnp.float32)      # targets arrive in native dtype

    def _accum(pv, tv):
        # Lane-resident partial sums (sublane reduce only); the single
        # cross-lane reduction + scalar Tversky math happen in the wrapper.
        pt_ref[...] += jnp.sum(pv * tv, axis=0, keepdims=True)
        p_ref[...] += jnp.sum(pv, axis=0, keepdims=True)
        tt_ref[...] += jnp.sum(tv, axis=0, keepdims=True)

    # Hot path: full block -> no masking work at all.
    @pl.when(rows_rem >= block_rows)
    def _full():
        _accum(p, t)

    # Cold path: last partial block (block_rows does not divide rows) or a
    # phantom block from an uneven split -- mask out-of-range rows.
    @pl.when(rows_rem < block_rows)
    def _partial():
        rid = lax.broadcasted_iota(jnp.int32, (block_rows, _LANE), 0)
        valid = rid < rows_rem
        _accum(jnp.where(valid, p, 0.0), jnp.where(valid, t, 0.0))


def _pallas_partial_sums(x, t):
    """x, t: flat 1-D arrays (same length). Returns f32 (sum p*t, sum p, sum t)."""
    n = x.shape[0]

    # Lane alignment: a (rows, 128) view of a contiguous buffer is a free
    # bitcast when n % 128 == 0 (no pad, no copy).  Only otherwise do we pad
    # the last <128 lanes with a sentinel logit (sigmoid -> exactly 0) and a 0
    # target, so padded elements contribute nothing and need no in-kernel mask.
    pad = (-n) % _LANE
    if pad:
        if jnp.issubdtype(x.dtype, jnp.floating):
            sentinel = jnp.finfo(x.dtype).min
        else:
            sentinel = jnp.iinfo(x.dtype).min
        x = jnp.pad(x, (0, pad), constant_values=sentinel)
        t = jnp.pad(t, (0, pad))
    rows = (n + pad) // _LANE
    x2 = x.reshape(rows, _LANE)
    t2 = t.reshape(rows, _LANE)

    x_isz = x2.dtype.itemsize
    t_isz = t2.dtype.itemsize

    # Per-chip VMEM budget (v7x: 64 MiB/TC vs 128 MiB on v5e/v6e).
    try:
        phys_vmem = int(pltpu.get_tpu_info().vmem_capacity_bytes)
    except Exception:
        phys_vmem = 64 << 20                # conservative (v7x per-core)
    budget = max(phys_vmem - (16 << 20), 24 << 20)

    def _vmem_need(br):
        blk = br * _LANE
        # 2 pipeline buffers per input + ~6 full-tile f32 temporaries + slack.
        return 2 * blk * (x_isz + t_isz) + 6 * blk * 4 + (2 << 20)

    if rows <= _MAX_BLOCK_ROWS:
        block_rows = rows                   # single block == full array
    else:
        block_rows = _MAX_BLOCK_ROWS
        while block_rows > 1024 and _vmem_need(block_rows) > budget:
            block_rows //= 2                # stays a multiple of 8

    total_blocks = pl.cdiv(rows, block_rows)

    # Split the stream across v7x's two TensorCores only when it is exact (or
    # large enough that a single phantom block is negligible), so no/one
    # redundant tail-tile DMA and balanced per-core work.
    if total_blocks % _NUM_SPLITS == 0:
        splits = _NUM_SPLITS
    elif total_blocks >= 4 * _NUM_SPLITS:
        splits = _NUM_SPLITS
    else:
        splits = 1
    blocks_per_split = pl.cdiv(total_blocks, splits)
    last_blk = total_blocks - 1

    def in_map(s, i):
        blk = s * blocks_per_split + i
        return (jnp.minimum(blk, last_blk), 0)   # keep phantom-block DMA in bounds

    out_map = lambda s, i: (s, 0)

    kernel = functools.partial(
        _focal_tversky_kernel, rows=rows, block_rows=block_rows,
        blocks_per_split=blocks_per_split)

    in_bytes = x2.size * x_isz + t2.size * t_isz
    vmem_limit = int(min(max(budget, 32 << 20), 100 << 20))

    pt_part, p_part, t_part = pl.pallas_call(
        kernel,
        out_shape=(
            jax.ShapeDtypeStruct((splits, _LANE), jnp.float32),
            jax.ShapeDtypeStruct((splits, _LANE), jnp.float32),
            jax.ShapeDtypeStruct((splits, _LANE), jnp.float32),
        ),
        grid_spec=pltpu.PrefetchScalarGridSpec(
            num_scalar_prefetch=0,
            grid=(splits, blocks_per_split),
            in_specs=[
                pl.BlockSpec((block_rows, _LANE), in_map),
                pl.BlockSpec((block_rows, _LANE), in_map),
            ],
            out_specs=[
                pl.BlockSpec((1, _LANE), out_map),
                pl.BlockSpec((1, _LANE), out_map),
                pl.BlockSpec((1, _LANE), out_map),
            ],
        ),
        compiler_params=pltpu.CompilerParams(
            dimension_semantics=("parallel", "arbitrary"),
            vmem_limit_bytes=vmem_limit),
        cost_estimate=pl.CostEstimate(
            flops=6 * n, transcendentals=n,
            bytes_accessed=in_bytes + 3 * splits * _LANE * 4),
    )(x2, t2)

    return jnp.sum(pt_part), jnp.sum(p_part), jnp.sum(t_part)


def focal_tversky_loss(inputs, targets, smooth=1.0, alpha=0.5, beta=0.5,
                       gamma=1.0, *, force_pallas=False):
    """Pallas TPU implementation of FocalTverskyLoss.forward. Returns f32 scalar."""
    x = jnp.reshape(inputs, (-1,))
    t = jnp.reshape(targets, (-1,))   # targets kept in native (narrow) dtype
    n = x.shape[0]

    if n < _SMALL_N and not force_pallas:
        # Small-N fast path: fixed pallas_call/grid/DMA setup cost dominates here.
        p = jax.nn.sigmoid(x.astype(jnp.float32))
        tf = t.astype(jnp.float32)
        tp, sp, st = jnp.sum(p * tf), jnp.sum(p), jnp.sum(tf)
    else:
        tp, sp, st = _pallas_partial_sums(x, t)

    fp = sp - tp          # == sum((1 - t) * p) exactly
    fn = st - tp          # == sum(t * (1 - p)) exactly
    tversky = (tp + smooth) / (tp + alpha * fp + beta * fn + smooth)
    return (1.0 - tversky) ** gamma


def _reference(inputs, targets, smooth=1.0, alpha=0.5, beta=0.5, gamma=1.0):
    p = jax.nn.sigmoid(inputs.astype(jnp.float32)).reshape(-1)
    t = targets.astype(jnp.float32).reshape(-1)
    tp = jnp.sum(p * t)
    fp = jnp.sum((1.0 - t) * p)
    fn = jnp.sum(t * (1.0 - p))
    tversky = (tp + smooth) / (tp + alpha * fp + beta * fn + smooth)
    return (1.0 - tversky) ** gamma


if __name__ == "__main__":
    key = jax.random.PRNGKey(0)
    keys = jax.random.split(key, 8)

    # 1) Canonical small NCHW shape (batch=2, channels=4, spatial=16); force the
    #    Pallas path so the kernel itself runs even below the small-N cutoff.
    x = jax.random.normal(keys[0], (2, 4, 16, 16), dtype=jnp.float32)
    tgt = (jax.random.uniform(keys[1], (2, 4, 16, 16)) > 0.5).astype(jnp.float32)
    loss = focal_tversky_loss(x, tgt, force_pallas=True)
    jax.block_until_ready(loss)
    ref = _reference(x, tgt)
    assert jnp.allclose(loss, ref, atol=1e-5, rtol=1e-4), (loss, ref)

    # 2) Same small shape through the small-N pure-JAX fast path.
    loss_s = focal_tversky_loss(x, tgt)
    jax.block_until_ready(loss_s)
    assert jnp.allclose(loss_s, ref, atol=1e-5, rtol=1e-4), (loss_s, ref)

    # 3) Ragged element count (N % 128 != 0 -> sentinel tail padding), custom
    #    hyper-parameters, forced through the kernel.
    xr = jax.random.normal(keys[2], (2, 3, 7, 5), dtype=jnp.float32)
    tr = (jax.random.uniform(keys[3], (2, 3, 7, 5)) > 0.5).astype(jnp.float32)
    loss_r = focal_tversky_loss(xr, tr, smooth=1.0, alpha=0.7, beta=0.3,
                                gamma=2.0, force_pallas=True)
    jax.block_until_ready(loss_r)
    ref_r = _reference(xr, tr, 1.0, 0.7, 0.3, 2.0)
    assert jnp.allclose(loss_r, ref_r, atol=1e-5, rtol=1e-4), (loss_r, ref_r)

    # 4) Large aligned input: two full 8192-row blocks -> both parallel splits;
    #    targets kept narrow (bf16) end-to-end.
    xb = jax.random.normal(keys[4], (8, 4, 256, 256), dtype=jnp.float32)
    tb = (jax.random.uniform(keys[5], (8, 4, 256, 256)) > 0.5).astype(jnp.bfloat16)
    loss_b = focal_tversky_loss(xb, tb)
    jax.block_until_ready(loss_b)
    ref_b = _reference(xb, tb)
    assert jnp.allclose(loss_b, ref_b, atol=1e-5, rtol=1e-4), (loss_b, ref_b)

    # 5) Multi-block stream with a partial tail block (masked cold path) plus a
    #    <128-element sentinel-padded lane tail.
    xc = jax.random.normal(keys[6], (3, 7, 321, 417), dtype=jnp.float32)
    tc = (jax.random.uniform(keys[7], (3, 7, 321, 417)) > 0.5).astype(jnp.float32)
    loss_c = focal_tversky_loss(xc, tc)
    jax.block_until_ready(loss_c)
    ref_c = _reference(xc, tc)
    assert jnp.allclose(loss_c, ref_c, atol=1e-5, rtol=1e-4), (loss_c, ref_c)

    print("KERNEL_OK")
</pallas_src>

<mosaic_0001>
module attributes {stable_mosaic.version = 11 : i64} {
  func.func @_focal_tversky_kernel(%arg0: i32, %arg1: i32, %arg2: memref<16x128xf32, #tpu.memory_space<vmem>>, %arg3: memref<16x128xf32, #tpu.memory_space<vmem>>, %arg4: memref<1x128xf32, #tpu.memory_space<vmem>>, %arg5: memref<1x128xf32, #tpu.memory_space<vmem>>, %arg6: memref<1x128xf32, #tpu.memory_space<vmem>>) attributes {dimension_semantics = [#tpu.dimension_semantics<parallel>, #tpu.dimension_semantics<arbitrary>], iteration_bounds = array<i64: 1, 1>, scalar_prefetch = 0 : i64, scratch_operands = 0 : i64, tpu.core_type = #tpu.core_type<tc>, window_params = [{transform_indices = @transform_0, window_bounds = array<i64: 16, 128>}, {transform_indices = @transform_1, window_bounds = array<i64: 16, 128>}, {transform_indices = @transform_2, window_bounds = array<i64: 1, 128>}, {transform_indices = @transform_3, window_bounds = array<i64: 1, 128>}, {transform_indices = @transform_4, window_bounds = array<i64: 1, 128>}]} {
    %c0_i32 = arith.constant 0 : i32
    %0 = arith.cmpi eq, %arg1, %c0_i32 : i32
    %1 = arith.extui %0 : i1 to i32
    %c0_i32_0 = arith.constant 0 : i32
    %2 = arith.cmpi ne, %1, %c0_i32_0 : i32
    scf.if %2 {
      %cst_11 = arith.constant 0.000000e+00 : f32
      %22 = vector.broadcast %cst_11 : f32 to vector<1x128xf32>
      %c0_12 = arith.constant 0 : index
      %c0_13 = arith.constant 0 : index
      %23 = vector.load %arg4[%c0_12, %c0_13] : memref<1x128xf32, #tpu.memory_space<vmem>>, vector<1x128xf32>
      tpu.vector_store %arg4[%c0_12, %c0_13], %22 {strides = array<i32>} : memref<1x128xf32, #tpu.memory_space<vmem>>, vector<1x128xf32>,
      %cst_14 = arith.constant 0.000000e+00 : f32
      %24 = vector.broadcast %cst_14 : f32 to vector<1x128xf32>
      %c0_15 = arith.constant 0 : index
      %c0_16 = arith.constant 0 : index
      %25 = vector.load %arg5[%c0_15, %c0_16] : memref<1x128xf32, #tpu.memory_space<vmem>>, vector<1x128xf32>
      tpu.vector_store %arg5[%c0_15, %c0_16], %24 {strides = array<i32>} : memref<1x128xf32, #tpu.memory_space<vmem>>, vector<1x128xf32>,
      %cst_17 = arith.constant 0.000000e+00 : f32
      %26 = vector.broadcast %cst_17 : f32 to vector<1x128xf32>
      %c0_18 = arith.constant 0 : index
      %c0_19 = arith.constant 0 : index
      %27 = vector.load %arg6[%c0_18, %c0_19] : memref<1x128xf32, #tpu.memory_space<vmem>>, vector<1x128xf32>
      tpu.vector_store %arg6[%c0_18, %c0_19], %26 {strides = array<i32>} : memref<1x128xf32, #tpu.memory_space<vmem>>, vector<1x128xf32>,
    } else {
    }
    %c1_i32 = arith.constant 1 : i32
    %3 = arith.muli %arg0, %c1_i32 : i32
    %4 = arith.addi %3, %arg1 : i32
    %c16_i32 = arith.constant 16 : i32
    %5 = arith.muli %4, %c16_i32 : i32
    %c16_i32_1 = arith.constant 16 : i32
    %6 = arith.subi %c16_i32_1, %5 : i32
    %c0 = arith.constant 0 : index
    %c0_2 = arith.constant 0 : index
    %7 = vector.load %arg2[%c0, %c0_2] : memref<16x128xf32, #tpu.memory_space<vmem>>, vector<16x128xf32>
    %cst = arith.constant 5.000000e-01 : f32
    %8 = vector.broadcast %cst : f32 to vector<16x128xf32>
    %9 = arith.mulf %8, %7 : vector<16x128xf32>
    %10 = math.tanh %9 : vector<16x128xf32>
    %cst_3 = arith.constant 5.000000e-01 : f32
    %11 = vector.broadcast %cst_3 : f32 to vector<16x128xf32>
    %12 = arith.mulf %11, %10 : vector<16x128xf32>
    %cst_4 = arith.constant 5.000000e-01 : f32
    %13 = vector.broadcast %cst_4 : f32 to vector<16x128xf32>
    %14 = arith.addf %12, %13 : vector<16x128xf32>
    %c0_5 = arith.constant 0 : index
    %c0_6 = arith.constant 0 : index
    %15 = vector.load %arg3[%c0_5, %c0_6] : memref<16x128xf32, #tpu.memory_space<vmem>>, vector<16x128xf32>
    %c16_i32_7 = arith.constant 16 : i32
    %16 = arith.cmpi sge, %6, %c16_i32_7 : i32
    %17 = arith.extui %16 : i1 to i32
    %c0_i32_8 = arith.constant 0 : i32
    %18 = arith.cmpi ne, %17, %c0_i32_8 : i32
    scf.if %18 {
      %c0_11 = arith.constant 0 : index
      %c0_12 = arith.constant 0 : index
      %22 = vector.load %arg4[%c0_11, %c0_12] : memref<1x128xf32, #tpu.memory_space<vmem>>, vector<1x128xf32>
      %23 = arith.mulf %14, %15 : vector<16x128xf32>
      %cst_13 = arith.constant dense<0.000000e+00> : vector<128xf32>
      %24 = vector.multi_reduction <add>, %23, %cst_13 [0] : vector<16x128xf32> to vector<128xf32>
      %25 = vector.shape_cast %24 : vector<128xf32> to vector<1x128xf32>
      %26 = arith.addf %22, %25 : vector<1x128xf32>
      %c0_14 = arith.constant 0 : index
      %c0_15 = arith.constant 0 : index
      %27 = vector.load %arg4[%c0_14, %c0_15] : memref<1x128xf32, #tpu.memory_space<vmem>>, vector<1x128xf32>
      tpu.vector_store %arg4[%c0_14, %c0_15], %26 {strides = array<i32>} : memref<1x128xf32, #tpu.memory_space<vmem>>, vector<1x128xf32>,
      %c0_16 = arith.constant 0 : index
      %c0_17 = arith.constant 0 : index
      %28 = vector.load %arg5[%c0_16, %c0_17] : memref<1x128xf32, #tpu.memory_space<vmem>>, vector<1x128xf32>
      %cst_18 = arith.constant dense<0.000000e+00> : vector<128xf32>
      %29 = vector.multi_reduction <add>, %14, %cst_18 [0] : vector<16x128xf32> to vector<128xf32>
      %30 = vector.shape_cast %29 : vector<128xf32> to vector<1x128xf32>
      %31 = arith.addf %28, %30 : vector<1x128xf32>
      %c0_19 = arith.constant 0 : index
      %c0_20 = arith.constant 0 : index
      %32 = vector.load %arg5[%c0_19, %c0_20] : memref<1x128xf32, #tpu.memory_space<vmem>>, vector<1x128xf32>
      tpu.vector_store %arg5[%c0_19, %c0_20], %31 {strides = array<i32>} : memref<1x128xf32, #tpu.memory_space<vmem>>, vector<1x128xf32>,
      %c0_21 = arith.constant 0 : index
      %c0_22 = arith.constant 0 : index
      %33 = vector.load %arg6[%c0_21, %c0_22] : memref<1x128xf32, #tpu.memory_space<vmem>>, vector<1x128xf32>
      %cst_23 = arith.constant dense<0.000000e+00> : vector<128xf32>
      %34 = vector.multi_reduction <add>, %15, %cst_23 [0] : vector<16x128xf32> to vector<128xf32>
      %35 = vector.shape_cast %34 : vector<128xf32> to vector<1x128xf32>
      %36 = arith.addf %33, %35 : vector<1x128xf32>
      %c0_24 = arith.constant 0 : index
      %c0_25 = arith.constant 0 : index
      %37 = vector.load %arg6[%c0_24, %c0_25] : memref<1x128xf32, #tpu.memory_space<vmem>>, vector<1x128xf32>
      tpu.vector_store %arg6[%c0_24, %c0_25], %36 {strides = array<i32>} : memref<1x128xf32, #tpu.memory_space<vmem>>, vector<1x128xf32>,
    } else {
    }
    %c16_i32_9 = arith.constant 16 : i32
    %19 = arith.cmpi slt, %6, %c16_i32_9 : i32
    %20 = arith.extui %19 : i1 to i32
    %c0_i32_10 = arith.constant 0 : i32
    %21 = arith.cmpi ne, %20, %c0_i32_10 : i32
    scf.if %21 {
      %22 = tpu.iota {dimensions = array<i32: 0>} : vector<16x128xi32>
      %23 = vector.broadcast %6 : i32 to vector<16x128xi32>
      %24 = arith.cmpi slt, %22, %23 : vector<16x128xi32>
      %cst_11 = arith.constant 0.000000e+00 : f32
      %25 = vector.broadcast %cst_11 : f32 to vector<16x128xf32>
      %26 = arith.select %24, %14, %25 : vector<16x128xi1>, vector<16x128xf32>
      %cst_12 = arith.constant 0.000000e+00 : f32
      %27 = vector.broadcast %cst_12 : f32 to vector<16x128xf32>
      %28 = arith.select %24, %15, %27 : vector<16x128xi1>, vector<16x128xf32>
      %c0_13 = arith.constant 0 : index
      %c0_14 = arith.constant 0 : index
      %29 = vector.load %arg4[%c0_13, %c0_14] : memref<1x128xf32, #tpu.memory_space<vmem>>, vector<1x128xf32>
      %30 = arith.mulf %26, %28 : vector<16x128xf32>
      %cst_15 = arith.constant dense<0.000000e+00> : vector<128xf32>
      %31 = vector.multi_reduction <add>, %30, %cst_15 [0] : vector<16x128xf32> to vector<128xf32>
      %32 = vector.shape_cast %31 : vector<128xf32> to vector<1x128xf32>
      %33 = arith.addf %29, %32 : vector<1x128xf32>
      %c0_16 = arith.constant 0 : index
      %c0_17 = arith.constant 0 : index
      %34 = vector.load %arg4[%c0_16, %c0_17] : memref<1x128xf32, #tpu.memory_space<vmem>>, vector<1x128xf32>
      tpu.vector_store %arg4[%c0_16, %c0_17], %33 {strides = array<i32>} : memref<1x128xf32, #tpu.memory_space<vmem>>, vector<1x128xf32>,
      %c0_18 = arith.constant 0 : index
      %c0_19 = arith.constant 0 : index
      %35 = vector.load %arg5[%c0_18, %c0_19] : memref<1x128xf32, #tpu.memory_space<vmem>>, vector<1x128xf32>
      %cst_20 = arith.constant dense<0.000000e+00> : vector<128xf32>
      %36 = vector.multi_reduction <add>, %26, %cst_20 [0] : vector<16x128xf32> to vector<128xf32>
      %37 = vector.shape_cast %36 : vector<128xf32> to vector<1x128xf32>
      %38 = arith.addf %35, %37 : vector<1x128xf32>
      %c0_21 = arith.constant 0 : index
      %c0_22 = arith.constant 0 : index
      %39 = vector.load %arg5[%c0_21, %c0_22] : memref<1x128xf32, #tpu.memory_space<vmem>>, vector<1x128xf32>
      tpu.vector_store %arg5[%c0_21, %c0_22], %38 {strides = array<i32>} : memref<1x128xf32, #tpu.memory_space<vmem>>, vector<1x128xf32>,
      %c0_23 = arith.constant 0 : index
      %c0_24 = arith.constant 0 : index
      %40 = vector.load %arg6[%c0_23, %c0_24] : memref<1x128xf32, #tpu.memory_space<vmem>>, vector<1x128xf32>
      %cst_25 = arith.constant dense<0.000000e+00> : vector<128xf32>
      %41 = vector.multi_reduction <add>, %28, %cst_25 [0] : vector<16x128xf32> to vector<128xf32>
      %42 = vector.shape_cast %41 : vector<128xf32> to vector<1x128xf32>
      %43 = arith.addf %40, %42 : vector<1x128xf32>
      %c0_26 = arith.constant 0 : index
      %c0_27 = arith.constant 0 : index
      %44 = vector.load %arg6[%c0_26, %c0_27] : memref<1x128xf32, #tpu.memory_space<vmem>>, vector<1x128xf32>
      tpu.vector_store %arg6[%c0_26, %c0_27], %43 {strides = array<i32>} : memref<1x128xf32, #tpu.memory_space<vmem>>, vector<1x128xf32>,
    } else {
    }
    return
  }
  func.func @transform_0(%arg0: i32, %arg1: i32) -> (i32, i32) {
    %c1_i32 = arith.constant 1 : i32
    %0 = arith.muli %arg0, %c1_i32 : i32
    %1 = arith.addi %0, %arg1 : i32
    %c0_i32 = arith.constant 0 : i32
    %2 = arith.minsi %1, %c0_i32 : i32
    %c0_i32_0 = arith.constant 0 : i32
    %c0_i32_1 = arith.constant 0 : i32
    return %2, %c0_i32_0 : i32, i32
  }
  func.func @transform_1(%arg0: i32, %arg1: i32) -> (i32, i32) {
    %c1_i32 = arith.constant 1 : i32
    %0 = arith.muli %arg0, %c1_i32 : i32
    %1 = arith.addi %0, %arg1 : i32
    %c0_i32 = arith.constant 0 : i32
    %2 = arith.minsi %1, %c0_i32 : i32
    %c0_i32_0 = arith.constant 0 : i32
    %c0_i32_1 = arith.constant 0 : i32
    return %2, %c0_i32_0 : i32, i32
  }
  func.func @transform_2(%arg0: i32, %arg1: i32) -> (i32, i32) {
    %c0_i32 = arith.constant 0 : i32
    %c0_i32_0 = arith.constant 0 : i32
    return %arg0, %c0_i32 : i32, i32
  }
  func.func @transform_3(%arg0: i32, %arg1: i32) -> (i32, i32) {
    %c0_i32 = arith.constant 0 : i32
    %c0_i32_0 = arith.constant 0 : i32
    return %arg0, %c0_i32 : i32, i32
  }
  func.func @transform_4(%arg0: i32, %arg1: i32) -> (i32, i32) {
    %c0_i32 = arith.constant 0 : i32
    %c0_i32_0 = arith.constant 0 : i32
    return %arg0, %c0_i32 : i32, i32
  }
}

</mosaic_0001>

<llo_original>
// kernel: tpu_custom_call.1
$region0: #{tpu_custom_call.1}
  #allocation0 [shape = 'u32[]', space=smem, size = 0x4, offset = 0x4, fixed_abs, tag = 'smem constant byte address 0x4 - core index']
  #allocation1 [shape = 'u32[144,128]{1,0:T(1,128)}', space=vmem, size = 0x12000, scoped, tag = 'internal scratch']
  %s0 = inlined_call_operand.hbm [shape: f32[16,128], index: 0, kind: input, shape index: {}]
  %s1 = inlined_call_operand.hbm [shape: f32[16,128], index: 1, kind: input, shape index: {}]
  %s2 = inlined_call_operand.hbm [shape: f32[1,128], index: 2, kind: output, shape index: {0}]
  %s3 = inlined_call_operand.hbm [shape: f32[1,128], index: 3, kind: output, shape index: {1}]
  %s4 = inlined_call_operand.hbm [shape: f32[1,128], index: 4, kind: output, shape index: {2}]
  %5 = xla_tuple %s2, %s3, %s4
  %s6 = sld [smem:[#allocation0]]
  $region54: #{tpu_custom_call.1} parent=0
    _
  %s8 = ssub.s32 1, %s6
  %s9 = scalar_select 0, %s8, %s6
  $region1: #{tpu_custom_call.1} parent=0
    #allocation2 [shape = 'u8[8192]{0}', space=vmem, size = 0x2000, scoped, tag = 'input window, operand 0, single buffered']
    #allocation3 [shape = 's32[1]{0}', space=sflag, size = 0x4, scoped, tag = 'scoped memory for tpu_custom_call.1']
    #allocation4 [shape = 's32[1]{0}', space=sflag, size = 0x4, scoped, tag = 'scoped memory for tpu_custom_call.1']
    #allocation5 [shape = 'u8[8192]{0}', space=vmem, size = 0x2000, scoped, tag = 'input window, operand 1, single buffered']
    #allocation6 [shape = 's32[1]{0}', space=sflag, size = 0x4, scoped, tag = 'scoped memory for tpu_custom_call.1']
    #allocation7 [shape = 'u8[512]{0}', space=vmem, size = 0x400, scoped, tag = 'output window, operand 0, single buffered']
    #allocation8 [shape = 'u8[512]{0}', space=vmem, size = 0x400, scoped, tag = 'output window, operand 1, single buffered']
    #allocation9 [shape = 's32[1]{0}', space=sflag, size = 0x4, scoped, tag = 'scoped memory for tpu_custom_call.1']
    #allocation10 [shape = 'u8[512]{0}', space=vmem, size = 0x400, scoped, tag = 'output window, operand 2, single buffered']
    %10 = vsyncpa [#allocation3], 0
    %11 = vsyncpa [#allocation6], 0
    %12 = vsyncpa [#allocation4], 0
    %13 = vsyncpa [#allocation9], 0
    // Predicated region
    $region2: #{tpu_custom_call.1} parent=1 // pred_check
      _
    $region3: #{tpu_custom_call.1} parent=1 // pred_check_branch
      %15 = sbr.rel (0) target = $region5
    $region4: #{tpu_custom_call.1} parent=1 // pred_region
      %s16 = sadd.s32 0, 0
      %p17 = scmp.lt.s32.totalorder %s16, 0
      %s18 = scalar_select %p17, %s16, 0
      %s19 = smul.u32 2, %s18
      %s21 = ssub.s32 256, 256
      %22 = vsyncadd [#allocation3], %s21
      %s23 = smul.addr %s19, 128
      %s24 = scalar_lea.hbm %s0, %s23
      %s25 = sshll.u32 [#allocation2], 4
      %s26 = int_to_ptr.vmem [resolvable:$true] %s25
      %31 = dma.hbm_to_vmem [thread:$0]  %s24, 256, %s26, [#allocation3], 128, 128, 8
    $region5: #{tpu_custom_call.1} parent=1 // pred_fallthru
      _
    // Predicated region
    $region6: #{tpu_custom_call.1} parent=1 // pred_check
      _
    $region7: #{tpu_custom_call.1} parent=1 // pred_check_branch
      %33 = sbr.rel (0) target = $region9
    $region8: #{tpu_custom_call.1} parent=1 // pred_region
      %s34 = sadd.s32 0, 0
      %p35 = scmp.lt.s32.totalorder %s34, 0
      %s36 = scalar_select %p35, %s34, 0
      %s37 = smul.u32 2, %s36
      %s39 = ssub.s32 256, 256
      %40 = vsyncadd [#allocation6], %s39
      %s41 = smul.addr %s37, 128
      %s42 = scalar_lea.hbm %s1, %s41
      %s43 = sshll.u32 [#allocation5], 4
      %s44 = int_to_ptr.vmem [resolvable:$true] %s43
      %49 = dma.hbm_to_vmem [thread:$0]  %s42, 256, %s44, [#allocation6], 128, 128, 8
    $region9: #{tpu_custom_call.1} parent=1 // pred_fallthru
      _
    // Predicated region
    $region10: #{tpu_custom_call.1} parent=1 // pred_check
      _
    $region11: #{tpu_custom_call.1} parent=1 // pred_check_branch
      %51 = sbr.rel (0) target = $region13
    $region12: #{tpu_custom_call.1} parent=1 // pred_region
      %52 = dma.done [#allocation3], 256
    $region13: #{tpu_custom_call.1} parent=1 // pred_fallthru
      _
    // Predicated region
    $region14: #{tpu_custom_call.1} parent=1 // pred_check
      _
    $region15: #{tpu_custom_call.1} parent=1 // pred_check_branch
      %54 = sbr.rel (0) target = $region17
    $region16: #{tpu_custom_call.1} parent=1 // pred_region
      %55 = dma.done [#allocation6], 256
    $region17: #{tpu_custom_call.1} parent=1 // pred_fallthru
      _
    %s56 = sadd.s32 0, 0
    %p57 = scmp.lt.s32.totalorder %s56, 0
    %s58 = scalar_select %p57, %s56, 0
    %s59 = smul.u32 2, %s58
    %s60 = sadd.s32 0, 0
    %p61 = scmp.lt.s32.totalorder %s60, 0
    %s62 = scalar_select %p61, %s60, 0
    %s63 = smul.u32 2, %s62
    %p64 = scmp.eq.s32.totalorder 0, 0
    // Predicated region
    $region18: #{tpu_custom_call.1} parent=1 // pred_check
      %p65 = pneg %p64
    $region19: #{tpu_custom_call.1} parent=1 // pred_check_branch
      %67 = sbr.rel (%p65) target = $region21
    $region20: #{tpu_custom_call.1} parent=1 // pred_region
      %68 = vst [vmem:[#allocation7] sm:$0x1] 0.0
      %69 = vst [vmem:[#allocation8] sm:$0x1] 0.0
      %70 = vst [vmem:[#allocation10] sm:$0x1] 0.0
    $region21: #{tpu_custom_call.1} parent=1 // pred_fallthru
      _
    %s71 = sadd.s32 0, 0
    %s72 = smul.u32 %s71, 16
    %s73 = ssub.s32 16, %s72
    %v74 = vld [vmem:[#allocation2] sm:$0xff]
    %v75 = vld [vmem:[#allocation2 + $0x8] sm:$0xff]
    %v76 = vmul.f32 %v74, 0.5
    %v77 = vmul.f32 %v75, 0.5
    %v78 = vtanh.pop %v76
    %v79 = vtanh.pop %v77
    %v80 = vmul.f32 %v78, 0.5
    %v81 = vmul.f32 %v79, 0.5
    %v82 = vadd.f32 %v80, 0.5
    %v83 = vadd.f32 %v81, 0.5
    %v84 = vld [vmem:[#allocation5] sm:$0xff]
    %v85 = vld [vmem:[#allocation5 + $0x8] sm:$0xff]
    %p86 = scmp.ge.s32.totalorder %s73, 16
    // Predicated region
    $region22: #{tpu_custom_call.1} parent=1 // pred_check
      %p87 = pneg %p86
    $region23: #{tpu_custom_call.1} parent=1 // pred_check_branch
      %89 = sbr.rel (%p87) target = $region25
    $region24: #{tpu_custom_call.1} parent=1 // pred_region
      %v90 = vld [vmem:[#allocation7] sm:$0x1]
      %v91 = vmul.f32 %v82, %v84
      %v92 = vmul.f32 %v83, %v85
      %v93 = vadd.f32 %v91, %v92
      %v94 = vrot.slane %v93, 4
      %v95 = vadd.f32 %v93, %v94
      %v96 = vrot.slane %v95, 2
      %v97 = vadd.f32 %v95, %v96
      %v98 = vrot.slane %v97, 1
      %v99 = vadd.f32 %v97, %v98
      %v100 = vadd.f32 %v90, %v99
      %101 = vst [vmem:[#allocation7] sm:$0x1] %v100
      %v102 = vld [vmem:[#allocation8] sm:$0x1]
      %v103 = vadd.f32 %v82, %v83
      %v104 = vrot.slane %v103, 4
      %v105 = vadd.f32 %v103, %v104
      %v106 = vrot.slane %v105, 2
      %v107 = vadd.f32 %v105, %v106
      %v108 = vrot.slane %v107, 1
      %v109 = vadd.f32 %v107, %v108
      %v110 = vadd.f32 %v102, %v109
      %111 = vst [vmem:[#allocation8] sm:$0x1] %v110
      %v112 = vld [vmem:[#allocation10] sm:$0x1]
      %v113 = vadd.f32 %v84, %v85
      %v114 = vrot.slane %v113, 4
      %v115 = vadd.f32 %v113, %v114
      %v116 = vrot.slane %v115, 2
      %v117 = vadd.f32 %v115, %v116
      %v118 = vrot.slane %v117, 1
      %v119 = vadd.f32 %v117, %v118
      %v120 = vadd.f32 %v112, %v119
      %121 = vst [vmem:[#allocation10] sm:$0x1] %v120
    $region25: #{tpu_custom_call.1} parent=1 // pred_fallthru
      _
    %p122 = scmp.lt.s32.totalorder %s73, 16
    // Predicated region
    $region26: #{tpu_custom_call.1} parent=1 // pred_check
      %p123 = pneg %p122
    $region27: #{tpu_custom_call.1} parent=1 // pred_check_branch
      %125 = sbr.rel (%p123) target = $region29
    $region28: #{tpu_custom_call.1} parent=1 // pred_region
      %v126 = vlaneseq
      %v127 = vshrl.u32 %v126, 7
      %v128 = vadd.s32 %v127, 8
      %v129 = vstv %s73
      %vm130 = vcmp.lt.s32.totalorder %v127, %v129
      %vm131 = vcmp.lt.s32.totalorder %v128, %v129
      %v132 = vsel %vm130, %v82, 0.0
      %v133 = vsel %vm131, %v83, 0.0
      %v134 = vsel %vm130, %v84, 0.0
      %v135 = vsel %vm131, %v85, 0.0
      %v136 = vld [vmem:[#allocation7] sm:$0x1]
      %v137 = vmul.f32 %v132, %v134
      %v138 = vmul.f32 %v133, %v135
      %v139 = vadd.f32 %v137, %v138
      %v140 = vrot.slane %v139, 4
      %v141 = vadd.f32 %v139, %v140
      %v142 = vrot.slane %v141, 2
      %v143 = vadd.f32 %v141, %v142
      %v144 = vrot.slane %v143, 1
      %v145 = vadd.f32 %v143, %v144
      %v146 = vadd.f32 %v136, %v145
      %147 = vst [vmem:[#allocation7] sm:$0x1] %v146
      %v148 = vld [vmem:[#allocation8] sm:$0x1]
      %v149 = vadd.f32 %v132, %v133
      %v150 = vrot.slane %v149, 4
      %v151 = vadd.f32 %v149, %v150
      %v152 = vrot.slane %v151, 2
      %v153 = vadd.f32 %v151, %v152
      %v154 = vrot.slane %v153, 1
      %v155 = vadd.f32 %v153, %v154
      %v156 = vadd.f32 %v148, %v155
      %157 = vst [vmem:[#allocation8] sm:$0x1] %v156
      %v158 = vld [vmem:[#allocation10] sm:$0x1]
      %v159 = vadd.f32 %v134, %v135
      %v160 = vrot.slane %v159, 4
      %v161 = vadd.f32 %v159, %v160
      %v162 = vrot.slane %v161, 2
      %v163 = vadd.f32 %v161, %v162
      %v164 = vrot.slane %v163, 1
      %v165 = vadd.f32 %v163, %v164
      %v166 = vadd.f32 %v158, %v165
      %167 = vst [vmem:[#allocation10] sm:$0x1] %v166
    $region29: #{tpu_custom_call.1} parent=1 // pred_fallthru
      _
    // Predicated region
    $region30: #{tpu_custom_call.1} parent=1 // pred_check
      _
    $region31: #{tpu_custom_call.1} parent=1 // pred_check_branch
      %169 = sbr.rel (0) target = $region33
    $region32: #{tpu_custom_call.1} parent=1 // pred_region
      %s171 = ssub.s32 16, 16
      %172 = vsyncadd [#allocation4], %s171
      %s174 = sshll.u32 [#allocation7], 4
      %s175 = int_to_ptr.vmem [resolvable:$true] %s174
      %177 = dma.vmem_to_hbm [thread:$0]  %s175, 16, %s2, [#allocation4]
    $region33: #{tpu_custom_call.1} parent=1 // pred_fallthru
      _
    // Predicated region
    $region34: #{tpu_custom_call.1} parent=1 // pred_check
      _
    $region35: #{tpu_custom_call.1} parent=1 // pred_check_branch
      %179 = sbr.rel (0) target = $region37
    $region36: #{tpu_custom_call.1} parent=1 // pred_region
      %s181 = ssub.s32 16, 16
      %182 = vsyncadd [#allocation9], %s181
      %s184 = sshll.u32 [#allocation8], 4
      %s185 = int_to_ptr.vmem [resolvable:$true] %s184
      %187 = dma.vmem_to_hbm [thread:$0]  %s185, 16, %s3, [#allocation9]
    $region37: #{tpu_custom_call.1} parent=1 // pred_fallthru
      _
    // Predicated region
    $region38: #{tpu_custom_call.1} parent=1 // pred_check
      _
    $region39: #{tpu_custom_call.1} parent=1 // pred_check_branch
      %189 = sbr.rel (0) target = $region41
    $region40: #{tpu_custom_call.1} parent=1 // pred_region
      %s191 = ssub.s32 16, 16
      %192 = vsyncadd [#allocation9], %s191
      %s194 = sshll.u32 [#allocation10], 4
      %s195 = int_to_ptr.vmem [resolvable:$true] %s194
      %197 = dma.vmem_to_hbm [thread:$0]  %s195, 16, %s4, [#allocation9]
    $region41: #{tpu_custom_call.1} parent=1 // pred_fallthru
      _
    // Predicated region
    $region42: #{tpu_custom_call.1} parent=1 // pred_check
      _
    $region43: #{tpu_custom_call.1} parent=1 // pred_check_branch
      %199 = sbr.rel (0) target = $region45
    $region44: #{tpu_custom_call.1} parent=1 // pred_region
      %200 = dma.done [#allocation4], 16
    $region45: #{tpu_custom_call.1} parent=1 // pred_fallthru
      _
    // Predicated region
    $region46: #{tpu_custom_call.1} parent=1 // pred_check
      _
    $region47: #{tpu_custom_call.1} parent=1 // pred_check_branch
      %202 = sbr.rel (0) target = $region49
    $region48: #{tpu_custom_call.1} parent=1 // pred_region
      %203 = dma.done [#allocation9], 16
    $region49: #{tpu_custom_call.1} parent=1 // pred_fallthru
      _
    // Predicated region
    $region50: #{tpu_custom_call.1} parent=1 // pred_check
      _
    $region51: #{tpu_custom_call.1} parent=1 // pred_check_branch
      %205 = sbr.rel (0) target = $region53
    $region52: #{tpu_custom_call.1} parent=1 // pred_region
      %206 = dma.done [#allocation9], 16
    $region53: #{tpu_custom_call.1} parent=1 // pred_fallthru
      _
    %207 = vsyncpa [#allocation3], 1
    %208 = vsyncpa [#allocation6], 1
    %209 = vsyncpa [#allocation4], 1
    %210 = vsyncpa [#allocation9], 1

</llo_original>
